<compile_context>
chip_gen: v5e
topology: v5e:2x2
jax: 0.10.0
libtpu: 0.0.40
codegen_flags: <defaults>
</compile_context>

<pallas_src>
import functools

import jax
import jax.numpy as jnp
from jax.experimental import pallas as pl
from jax.experimental.pallas import tpu as pltpu


def _depthwise_same_conv(v, w_ref, b_ref, k, dil, pos):
    """Depthwise 1-D cross-correlation with 'same' zero padding, stride 1.

    v:     (C, L) f32 value (L on lanes)
    w_ref: (C, k) per-channel taps
    b_ref: (C, 1) per-channel bias (zeros when bias=False)
    dil:   dilation
    pos:   (C, L) int32 lane-index iota (precomputed once)
    """
    C, L = v.shape
    total = dil * (k - 1)
    left = total // 2                      # PyTorch 'same': left = total // 2
    acc = jnp.zeros((C, L), jnp.float32)
    for j in range(k):                     # k is small & static -> unrolled
        off = j * dil - left               # static Python int
        if off == 0:
            tap = v
        else:
            # shifted[:, l] == v[:, (l + off) % L]  (np.roll convention)
            shifted = pltpu.roll(v, shift=(-off) % L, axis=1)
            src = pos + off
            tap = jnp.where((src >= 0) & (src < L), shifted, 0.0)
        acc = acc + w_ref[:, j:j + 1].astype(jnp.float32) * tap
    return acc + b_ref[...].astype(jnp.float32)


def lkc_kernel(x_ref, w1_ref, b1_ref, w2_ref, b2_ref, w3_ref, b3_ref, o_ref,
               *, k1, k2, dil):
    C, L = x_ref.shape
    pos = jax.lax.broadcasted_iota(jnp.int32, (C, L), 1)

    x = x_ref[...].astype(jnp.float32)                        # (C, L)
    y = _depthwise_same_conv(x, w1_ref, b1_ref, k1, 1, pos)   # depthwise_conv
    z = _depthwise_same_conv(y, w2_ref, b2_ref, k2, dil, pos) # depthwise_dila_conv

    # pointwise 1x1 conv: 2-D MXU matmul, C_in contraction, L on lanes.
    out = jnp.dot(w3_ref[...].astype(jnp.float32), z,
                  preferred_element_type=jnp.float32,
                  precision=jax.lax.Precision.HIGHEST)
    out = out + b3_ref[...].astype(jnp.float32)
    o_ref[...] = out.astype(o_ref.dtype)


def lkc_forward(x, w1, b1, w2, b2, w3, b3, *, k1, k2):
    """x: (N, dim, L); w1: (dim, k1); w2: (dim, k2); w3: (dim, dim); b*: (dim,)."""
    N, C, L = x.shape
    dil = (k1 + 1) // 2

    kern = functools.partial(lkc_kernel, k1=k1, k2=k2, dil=dil)
    flops = 2 * N * C * L * (k1 + k2 + C)
    bytes_accessed = 4 * (2 * N * C * L + C * (k1 + k2 + C) + 3 * C)

    # Reshape 1-D params to 2-D on the host side (no in-kernel reshapes).
    b1_2d = b1.reshape(C, 1)
    b2_2d = b2.reshape(C, 1)
    b3_2d = b3.reshape(C, 1)

    return pl.pallas_call(
        kern,
        out_shape=jax.ShapeDtypeStruct((N, C, L), x.dtype),
        grid=(N,),
        in_specs=[
            pl.BlockSpec((None, C, L), lambda n: (n, 0, 0)),   # x   -> (C, L) block
            pl.BlockSpec((C, k1), lambda n: (0, 0)),           # w1
            pl.BlockSpec((C, 1), lambda n: (0, 0)),            # b1
            pl.BlockSpec((C, k2), lambda n: (0, 0)),           # w2
            pl.BlockSpec((C, 1), lambda n: (0, 0)),            # b2
            pl.BlockSpec((C, C), lambda n: (0, 0)),            # w3 (pointwise)
            pl.BlockSpec((C, 1), lambda n: (0, 0)),            # b3
        ],
        out_specs=pl.BlockSpec((None, C, L), lambda n: (n, 0, 0)),
        compiler_params=pltpu.CompilerParams(
            dimension_semantics=("parallel",),        # megacore sharding on v7x
            vmem_limit_bytes=32 * 1024 * 1024,        # safe on v5e/v6e/v7x
        ),
        cost_estimate=pl.CostEstimate(
            flops=flops, transcendentals=0, bytes_accessed=bytes_accessed),
    )(x, w1, b1_2d, w2, b2_2d, w3, b3_2d)


def lkc_reference(x, w1, b1, w2, b2, w3, b3, *, k1, k2):
    """Pure-JAX reference using lax conv (matches PyTorch Conv1d 'same' exactly)."""
    dim = x.shape[1]
    dil = (k1 + 1) // 2
    dn = ("NCH", "OIH", "NCH")
    hi = jax.lax.Precision.HIGHEST
    y = jax.lax.conv_general_dilated(
        x, w1[:, None, :], window_strides=(1,), padding="SAME",
        rhs_dilation=(1,), dimension_numbers=dn, feature_group_count=dim,
        precision=hi) + b1[None, :, None]
    z = jax.lax.conv_general_dilated(
        y, w2[:, None, :], window_strides=(1,), padding="SAME",
        rhs_dilation=(dil,), dimension_numbers=dn, feature_group_count=dim,
        precision=hi) + b2[None, :, None]
    out = jax.lax.conv_general_dilated(
        z, w3[:, :, None], window_strides=(1,), padding="SAME",
        dimension_numbers=dn, precision=hi) + b3[None, :, None]
    return out


if __name__ == "__main__":
    # Small deterministic shapes consistent with the module:
    # LKC(dim=16, k1=5, k2=3, bias=True); x: (N=2, dim=16, L=256).
    # L is a multiple of 128 so the lane axis stays dense.
    N, dim, L = 2, 16, 256
    k1, k2, use_bias = 5, 3, True

    key = jax.random.PRNGKey(0)
    ks = jax.random.split(key, 7)
    x = jax.random.normal(ks[0], (N, dim, L), dtype=jnp.float32)
    # PyTorch weight shapes are (dim, 1, k1), (dim, 1, k2), (dim, dim, 1);
    # the singleton dims are squeezed on the host.
    w1 = jax.random.normal(ks[1], (dim, k1), dtype=jnp.float32) / jnp.sqrt(k1)
    w2 = jax.random.normal(ks[2], (dim, k2), dtype=jnp.float32) / jnp.sqrt(k2)
    w3 = jax.random.normal(ks[3], (dim, dim), dtype=jnp.float32) / jnp.sqrt(dim)
    if use_bias:
        b1 = 0.1 * jax.random.normal(ks[4], (dim,), dtype=jnp.float32)
        b2 = 0.1 * jax.random.normal(ks[5], (dim,), dtype=jnp.float32)
        b3 = 0.1 * jax.random.normal(ks[6], (dim,), dtype=jnp.float32)
    else:  # bias=False is the same kernel with zero biases
        b1 = b2 = b3 = jnp.zeros((dim,), jnp.float32)

    out = lkc_forward(x, w1, b1, w2, b2, w3, b3, k1=k1, k2=k2)
    out = jax.block_until_ready(out)

    ref = lkc_reference(x, w1, b1, w2, b2, w3, b3, k1=k1, k2=k2)
    assert out.shape == (N, dim, L)
    assert jnp.allclose(out, ref, atol=1e-4, rtol=1e-4), float(
        jnp.max(jnp.abs(out - ref)))

    print("KERNEL_OK")
</pallas_src>

<mosaic_0001>
module attributes {stable_mosaic.version = 11 : i64} {
  func.func @lkc_kernel(%arg0: i32, %arg1: memref<1x16x256xf32, #tpu.memory_space<vmem>>, %arg2: memref<16x5xf32, #tpu.memory_space<vmem>>, %arg3: memref<16x1xf32, #tpu.memory_space<vmem>>, %arg4: memref<16x3xf32, #tpu.memory_space<vmem>>, %arg5: memref<16x1xf32, #tpu.memory_space<vmem>>, %arg6: memref<16x16xf32, #tpu.memory_space<vmem>>, %arg7: memref<16x1xf32, #tpu.memory_space<vmem>>, %arg8: memref<1x16x256xf32, #tpu.memory_space<vmem>>) attributes {dimension_semantics = [#tpu.dimension_semantics<parallel>], iteration_bounds = array<i64: 2>, scalar_prefetch = 0 : i64, scratch_operands = 0 : i64, tpu.core_type = #tpu.core_type<tc>, window_params = [{transform_indices = @transform_0, window_bounds = array<i64: 1, 16, 256>}, {pipeline_mode = #tpu.pipeline_mode<synchronous>, transform_indices = @transform_1, window_bounds = array<i64: 16, 5>}, {pipeline_mode = #tpu.pipeline_mode<synchronous>, transform_indices = @transform_2, window_bounds = array<i64: 16, 1>}, {pipeline_mode = #tpu.pipeline_mode<synchronous>, transform_indices = @transform_3, window_bounds = array<i64: 16, 3>}, {pipeline_mode = #tpu.pipeline_mode<synchronous>, transform_indices = @transform_4, window_bounds = array<i64: 16, 1>}, {pipeline_mode = #tpu.pipeline_mode<synchronous>, transform_indices = @transform_5, window_bounds = array<i64: 16, 16>}, {pipeline_mode = #tpu.pipeline_mode<synchronous>, transform_indices = @transform_6, window_bounds = array<i64: 16, 1>}, {transform_indices = @transform_7, window_bounds = array<i64: 1, 16, 256>}]} {
    %0 = tpu.iota {dimensions = array<i32: 1>} : vector<16x256xi32>
    %c0 = arith.constant 0 : index
    %c0_0 = arith.constant 0 : index
    %c0_1 = arith.constant 0 : index
    %1 = vector.load %arg1[%c0, %c0_0, %c0_1] : memref<1x16x256xf32, #tpu.memory_space<vmem>>, vector<1x16x256xf32>
    %2 = vector.shape_cast %1 : vector<1x16x256xf32> to vector<16x256xf32>
    %cst = arith.constant 0.000000e+00 : f32
    %3 = vector.broadcast %cst : f32 to vector<16x256xf32>
    %c2_i32 = arith.constant 2 : i32
    %4 = tpu.dynamic_rotate %2 by %c2_i32 dim 1 : vector<16x256xf32>, i32 -> vector<16x256xf32>
    %c-2_i32 = arith.constant -2 : i32
    %5 = vector.broadcast %c-2_i32 : i32 to vector<16x256xi32>
    %6 = arith.addi %0, %5 : vector<16x256xi32>
    %c0_i32 = arith.constant 0 : i32
    %7 = vector.broadcast %c0_i32 : i32 to vector<16x256xi32>
    %8 = arith.cmpi sge, %6, %7 : vector<16x256xi32>
    %c256_i32 = arith.constant 256 : i32
    %9 = vector.broadcast %c256_i32 : i32 to vector<16x256xi32>
    %10 = arith.cmpi slt, %6, %9 : vector<16x256xi32>
    %11 = arith.andi %8, %10 : vector<16x256xi1>
    %cst_2 = arith.constant 0.000000e+00 : f32
    %12 = vector.broadcast %cst_2 : f32 to vector<16x256xf32>
    %13 = arith.select %11, %4, %12 : vector<16x256xi1>, vector<16x256xf32>
    %c0_3 = arith.constant 0 : index
    %c0_4 = arith.constant 0 : index
    %14 = vector.load %arg2[%c0_3, %c0_4] : memref<16x5xf32, #tpu.memory_space<vmem>>, vector<16x1xf32>
    %15 = vector.broadcast %14 : vector<16x1xf32> to vector<16x256xf32>
    %16 = arith.mulf %15, %13 : vector<16x256xf32>
    %17 = arith.addf %3, %16 : vector<16x256xf32>
    %c1_i32 = arith.constant 1 : i32
    %18 = tpu.dynamic_rotate %2 by %c1_i32 dim 1 : vector<16x256xf32>, i32 -> vector<16x256xf32>
    %c-1_i32 = arith.constant -1 : i32
    %19 = vector.broadcast %c-1_i32 : i32 to vector<16x256xi32>
    %20 = arith.addi %0, %19 : vector<16x256xi32>
    %c0_i32_5 = arith.constant 0 : i32
    %21 = vector.broadcast %c0_i32_5 : i32 to vector<16x256xi32>
    %22 = arith.cmpi sge, %20, %21 : vector<16x256xi32>
    %c256_i32_6 = arith.constant 256 : i32
    %23 = vector.broadcast %c256_i32_6 : i32 to vector<16x256xi32>
    %24 = arith.cmpi slt, %20, %23 : vector<16x256xi32>
    %25 = arith.andi %22, %24 : vector<16x256xi1>
    %cst_7 = arith.constant 0.000000e+00 : f32
    %26 = vector.broadcast %cst_7 : f32 to vector<16x256xf32>
    %27 = arith.select %25, %18, %26 : vector<16x256xi1>, vector<16x256xf32>
    %c0_8 = arith.constant 0 : index
    %c1 = arith.constant 1 : index
    %28 = vector.load %arg2[%c0_8, %c1] : memref<16x5xf32, #tpu.memory_space<vmem>>, vector<16x1xf32>
    %29 = vector.broadcast %28 : vector<16x1xf32> to vector<16x256xf32>
    %30 = arith.mulf %29, %27 : vector<16x256xf32>
    %31 = arith.addf %17, %30 : vector<16x256xf32>
    %c0_9 = arith.constant 0 : index
    %c2 = arith.constant 2 : index
    %32 = vector.load %arg2[%c0_9, %c2] : memref<16x5xf32, #tpu.memory_space<vmem>>, vector<16x1xf32>
    %33 = vector.broadcast %32 : vector<16x1xf32> to vector<16x256xf32>
    %34 = arith.mulf %33, %2 : vector<16x256xf32>
    %35 = arith.addf %31, %34 : vector<16x256xf32>
    %c255_i32 = arith.constant 255 : i32
    %36 = tpu.dynamic_rotate %2 by %c255_i32 dim 1 : vector<16x256xf32>, i32 -> vector<16x256xf32>
    %c1_i32_10 = arith.constant 1 : i32
    %37 = vector.broadcast %c1_i32_10 : i32 to vector<16x256xi32>
    %38 = arith.addi %0, %37 : vector<16x256xi32>
    %c0_i32_11 = arith.constant 0 : i32
    %39 = vector.broadcast %c0_i32_11 : i32 to vector<16x256xi32>
    %40 = arith.cmpi sge, %38, %39 : vector<16x256xi32>
    %c256_i32_12 = arith.constant 256 : i32
    %41 = vector.broadcast %c256_i32_12 : i32 to vector<16x256xi32>
    %42 = arith.cmpi slt, %38, %41 : vector<16x256xi32>
    %43 = arith.andi %40, %42 : vector<16x256xi1>
    %cst_13 = arith.constant 0.000000e+00 : f32
    %44 = vector.broadcast %cst_13 : f32 to vector<16x256xf32>
    %45 = arith.select %43, %36, %44 : vector<16x256xi1>, vector<16x256xf32>
    %c0_14 = arith.constant 0 : index
    %c3 = arith.constant 3 : index
    %46 = vector.load %arg2[%c0_14, %c3] : memref<16x5xf32, #tpu.memory_space<vmem>>, vector<16x1xf32>
    %47 = vector.broadcast %46 : vector<16x1xf32> to vector<16x256xf32>
    %48 = arith.mulf %47, %45 : vector<16x256xf32>
    %49 = arith.addf %35, %48 : vector<16x256xf32>
    %c254_i32 = arith.constant 254 : i32
    %50 = tpu.dynamic_rotate %2 by %c254_i32 dim 1 : vector<16x256xf32>, i32 -> vector<16x256xf32>
    %c2_i32_15 = arith.constant 2 : i32
    %51 = vector.broadcast %c2_i32_15 : i32 to vector<16x256xi32>
    %52 = arith.addi %0, %51 : vector<16x256xi32>
    %c0_i32_16 = arith.constant 0 : i32
    %53 = vector.broadcast %c0_i32_16 : i32 to vector<16x256xi32>
    %54 = arith.cmpi sge, %52, %53 : vector<16x256xi32>
    %c256_i32_17 = arith.constant 256 : i32
    %55 = vector.broadcast %c256_i32_17 : i32 to vector<16x256xi32>
    %56 = arith.cmpi slt, %52, %55 : vector<16x256xi32>
    %57 = arith.andi %54, %56 : vector<16x256xi1>
    %cst_18 = arith.constant 0.000000e+00 : f32
    %58 = vector.broadcast %cst_18 : f32 to vector<16x256xf32>
    %59 = arith.select %57, %50, %58 : vector<16x256xi1>, vector<16x256xf32>
    %c0_19 = arith.constant 0 : index
    %c4 = arith.constant 4 : index
    %60 = vector.load %arg2[%c0_19, %c4] : memref<16x5xf32, #tpu.memory_space<vmem>>, vector<16x1xf32>
    %61 = vector.broadcast %60 : vector<16x1xf32> to vector<16x256xf32>
    %62 = arith.mulf %61, %59 : vector<16x256xf32>
    %63 = arith.addf %49, %62 : vector<16x256xf32>
    %c0_20 = arith.constant 0 : index
    %c0_21 = arith.constant 0 : index
    %64 = vector.load %arg3[%c0_20, %c0_21] : memref<16x1xf32, #tpu.memory_space<vmem>>, vector<16x1xf32>
    %65 = vector.broadcast %64 : vector<16x1xf32> to vector<16x256xf32>
    %66 = arith.addf %63, %65 : vector<16x256xf32>
    %cst_22 = arith.constant 0.000000e+00 : f32
    %67 = vector.broadcast %cst_22 : f32 to vector<16x256xf32>
    %c3_i32 = arith.constant 3 : i32
    %68 = tpu.dynamic_rotate %66 by %c3_i32 dim 1 : vector<16x256xf32>, i32 -> vector<16x256xf32>
    %c-3_i32 = arith.constant -3 : i32
    %69 = vector.broadcast %c-3_i32 : i32 to vector<16x256xi32>
    %70 = arith.addi %0, %69 : vector<16x256xi32>
    %c0_i32_23 = arith.constant 0 : i32
    %71 = vector.broadcast %c0_i32_23 : i32 to vector<16x256xi32>
    %72 = arith.cmpi sge, %70, %71 : vector<16x256xi32>
    %c256_i32_24 = arith.constant 256 : i32
    %73 = vector.broadcast %c256_i32_24 : i32 to vector<16x256xi32>
    %74 = arith.cmpi slt, %70, %73 : vector<16x256xi32>
    %75 = arith.andi %72, %74 : vector<16x256xi1>
    %cst_25 = arith.constant 0.000000e+00 : f32
    %76 = vector.broadcast %cst_25 : f32 to vector<16x256xf32>
    %77 = arith.select %75, %68, %76 : vector<16x256xi1>, vector<16x256xf32>
    %c0_26 = arith.constant 0 : index
    %c0_27 = arith.constant 0 : index
    %78 = vector.load %arg4[%c0_26, %c0_27] : memref<16x3xf32, #tpu.memory_space<vmem>>, vector<16x1xf32>
    %79 = vector.broadcast %78 : vector<16x1xf32> to vector<16x256xf32>
    %80 = arith.mulf %79, %77 : vector<16x256xf32>
    %81 = arith.addf %67, %80 : vector<16x256xf32>
    %c0_28 = arith.constant 0 : index
    %c1_29 = arith.constant 1 : index
    %82 = vector.load %arg4[%c0_28, %c1_29] : memref<16x3xf32, #tpu.memory_space<vmem>>, vector<16x1xf32>
    %83 = vector.broadcast %82 : vector<16x1xf32> to vector<16x256xf32>
    %84 = arith.mulf %83, %66 : vector<16x256xf32>
    %85 = arith.addf %81, %84 : vector<16x256xf32>
    %c253_i32 = arith.constant 253 : i32
    %86 = tpu.dynamic_rotate %66 by %c253_i32 dim 1 : vector<16x256xf32>, i32 -> vector<16x256xf32>
    %c3_i32_30 = arith.constant 3 : i32
    %87 = vector.broadcast %c3_i32_30 : i32 to vector<16x256xi32>
    %88 = arith.addi %0, %87 : vector<16x256xi32>
    %c0_i32_31 = arith.constant 0 : i32
    %89 = vector.broadcast %c0_i32_31 : i32 to vector<16x256xi32>
    %90 = arith.cmpi sge, %88, %89 : vector<16x256xi32>
    %c256_i32_32 = arith.constant 256 : i32
    %91 = vector.broadcast %c256_i32_32 : i32 to vector<16x256xi32>
    %92 = arith.cmpi slt, %88, %91 : vector<16x256xi32>
    %93 = arith.andi %90, %92 : vector<16x256xi1>
    %cst_33 = arith.constant 0.000000e+00 : f32
    %94 = vector.broadcast %cst_33 : f32 to vector<16x256xf32>
    %95 = arith.select %93, %86, %94 : vector<16x256xi1>, vector<16x256xf32>
    %c0_34 = arith.constant 0 : index
    %c2_35 = arith.constant 2 : index
    %96 = vector.load %arg4[%c0_34, %c2_35] : memref<16x3xf32, #tpu.memory_space<vmem>>, vector<16x1xf32>
    %97 = vector.broadcast %96 : vector<16x1xf32> to vector<16x256xf32>
    %98 = arith.mulf %97, %95 : vector<16x256xf32>
    %99 = arith.addf %85, %98 : vector<16x256xf32>
    %c0_36 = arith.constant 0 : index
    %c0_37 = arith.constant 0 : index
    %100 = vector.load %arg5[%c0_36, %c0_37] : memref<16x1xf32, #tpu.memory_space<vmem>>, vector<16x1xf32>
    %101 = vector.broadcast %100 : vector<16x1xf32> to vector<16x256xf32>
    %102 = arith.addf %99, %101 : vector<16x256xf32>
    %c0_38 = arith.constant 0 : index
    %c0_39 = arith.constant 0 : index
    %103 = vector.load %arg6[%c0_38, %c0_39] : memref<16x16xf32, #tpu.memory_space<vmem>>, vector<16x16xf32>
    %cst_40 = arith.constant dense<0.000000e+00> : vector<16x256xf32>
    %104 = tpu.matmul %103, %102, %cst_40 {dimension_numbers = #tpu.dot_dimension_numbers<[1], [0], [0], [1], [0, 0, 1, 1], [], []>, precision = #tpu.contract_precision<fp32>} : vector<16x16xf32>, vector<16x256xf32>, vector<16x256xf32> -> vector<16x256xf32>
    %c0_41 = arith.constant 0 : index
    %c0_42 = arith.constant 0 : index
    %105 = vector.load %arg7[%c0_41, %c0_42] : memref<16x1xf32, #tpu.memory_space<vmem>>, vector<16x1xf32>
    %106 = vector.broadcast %105 : vector<16x1xf32> to vector<16x256xf32>
    %107 = arith.addf %104, %106 : vector<16x256xf32>
    %c0_43 = arith.constant 0 : index
    %c0_44 = arith.constant 0 : index
    %c0_45 = arith.constant 0 : index
    %108 = vector.load %arg8[%c0_43, %c0_44, %c0_45] : memref<1x16x256xf32, #tpu.memory_space<vmem>>, vector<1x16x256xf32>
    %109 = vector.shape_cast %108 : vector<1x16x256xf32> to vector<16x256xf32>
    %110 = vector.shape_cast %107 : vector<16x256xf32> to vector<1x16x256xf32>
    tpu.vector_store %arg8[%c0_43, %c0_44, %c0_45], %110 {strides = array<i32>} : memref<1x16x256xf32, #tpu.memory_space<vmem>>, vector<1x16x256xf32>,
    return
  }
  func.func @transform_0(%arg0: i32) -> (i32, i32, i32) {
    %c0_i32 = arith.constant 0 : i32
    %c0_i32_0 = arith.constant 0 : i32
    %c0_i32_1 = arith.constant 0 : i32
    return %arg0, %c0_i32, %c0_i32_0 : i32, i32, i32
  }
  func.func @transform_1(%arg0: i32) -> (i32, i32) {
    %c0_i32 = arith.constant 0 : i32
    %c0_i32_0 = arith.constant 0 : i32
    %c0_i32_1 = arith.constant 0 : i32
    return %c0_i32, %c0_i32_0 : i32, i32
  }
  func.func @transform_2(%arg0: i32) -> (i32, i32) {
    %c0_i32 = arith.constant 0 : i32
    %c0_i32_0 = arith.constant 0 : i32
    %c0_i32_1 = arith.constant 0 : i32
    return %c0_i32, %c0_i32_0 : i32, i32
  }
  func.func @transform_3(%arg0: i32) -> (i32, i32) {
    %c0_i32 = arith.constant 0 : i32
    %c0_i32_0 = arith.constant 0 : i32
    %c0_i32_1 = arith.constant 0 : i32
    return %c0_i32, %c0_i32_0 : i32, i32
  }
  func.func @transform_4(%arg0: i32) -> (i32, i32) {
    %c0_i32 = arith.constant 0 : i32
    %c0_i32_0 = arith.constant 0 : i32
    %c0_i32_1 = arith.constant 0 : i32
    return %c0_i32, %c0_i32_0 : i32, i32
  }
  func.func @transform_5(%arg0: i32) -> (i32, i32) {
    %c0_i32 = arith.constant 0 : i32
    %c0_i32_0 = arith.constant 0 : i32
    %c0_i32_1 = arith.constant 0 : i32
    return %c0_i32, %c0_i32_0 : i32, i32
  }
  func.func @transform_6(%arg0: i32) -> (i32, i32) {
    %c0_i32 = arith.constant 0 : i32
    %c0_i32_0 = arith.constant 0 : i32
    %c0_i32_1 = arith.constant 0 : i32
    return %c0_i32, %c0_i32_0 : i32, i32
  }
  func.func @transform_7(%arg0: i32) -> (i32, i32, i32) {
    %c0_i32 = arith.constant 0 : i32
    %c0_i32_0 = arith.constant 0 : i32
    %c0_i32_1 = arith.constant 0 : i32
    return %arg0, %c0_i32, %c0_i32_0 : i32, i32, i32
  }
}

</mosaic_0001>

<llo_original>
// kernel: tpu_custom_call.1
$region0: #{tpu_custom_call.1}
  #allocation0 [shape = 'u32[]', space=smem, size = 0x4, offset = 0x4, fixed_abs, tag = 'smem constant byte address 0x4 - core index']
  #allocation1 [shape = 'u32[72,128]{1,0:T(1,128)}', space=vmem, size = 0x9000, scoped, tag = 'internal scratch']
  %s0 = inlined_call_operand.vmem [shape: f32[2,16,256], index: 0, kind: input, shape index: {}]
  %s1 = inlined_call_operand.vmem [shape: f32[16,5], index: 1, kind: input, shape index: {}]
  %s2 = inlined_call_operand.vmem [shape: f32[16,1], index: 2, kind: input, shape index: {}]
  %s3 = inlined_call_operand.vmem [shape: f32[16,3], index: 3, kind: input, shape index: {}]
  %s4 = inlined_call_operand.vmem [shape: f32[16,1], index: 4, kind: input, shape index: {}]
  %s5 = inlined_call_operand.vmem [shape: f32[16,16], index: 5, kind: input, shape index: {}]
  %s6 = inlined_call_operand.vmem [shape: f32[16,1], index: 6, kind: input, shape index: {}]
  %s7 = inlined_call_operand.hbm [shape: f32[2,16,256], index: 7, kind: output, shape index: {}]
  %s8 = sld [smem:[#allocation0]]
  $region61: #{tpu_custom_call.1} parent=0
    _
  %s10 = ssub.s32 1, %s8
  %s11 = scalar_select 0, %s10, %s8
  $region1: #{tpu_custom_call.1} parent=0
    #allocation2 [shape = 'u8[32768]{0}', space=vmem, size = 0x8000, scoped, tag = 'output window, operand 0']
    #allocation3 [shape = 's32[2]{0}', space=sflag, size = 0x8, scoped, tag = 'scoped memory for tpu_custom_call.1']
    %12 = vsyncpa [#allocation3], 0
    %s13 = scalar_lea.sflag [#allocation3], 1
    %14 = vsyncpa %s13, 0
    loop: start=0, step=1, limit=4
    $region2: #{tpu_custom_call.1} parent=1 // loop_pre_header
      _
    $region3: #{tpu_custom_call.1} parent=1 // loop_header
      %s16 = sphi 0, %s20
      %p17 = scmp.ge.s32.totalorder %s16, 4
      %s26 = sphi 0, %s28
      %s29 = sphi 0, %s26
      %s30 = sphi 0, %s29
      %s46 = sphi 0, %s30
      %s50 = sphi 0, %s50
      %s52 = sphi 0, %s50
      %s53 = sphi 0, %s52
      %s67 = sphi 0, %s53
      %s71 = sphi 0, %s71
      %s73 = sphi 0, %s71
      %s74 = sphi 0, %s73
      %s88 = sphi 0, %s74
      %s92 = sphi 0, %s92
      %s94 = sphi 0, %s92
      %s95 = sphi 0, %s94
      %s109 = sphi 0, %s95
      %s113 = sphi 0, %s113
      %s115 = sphi 0, %s113
      %s116 = sphi 0, %s115
      %s130 = sphi 0, %s116
      %s134 = sphi 0, %s134
      %s136 = sphi 0, %s134
      %s137 = sphi 0, %s136
      %s151 = sphi 0, %s137
      %s155 = sphi 0, %s155
      %s157 = sphi 0, %s155
      %s158 = sphi 0, %s157
      %s172 = sphi 0, %s158
      %s178 = sphi 0, %s180
      %s181 = sphi 0, %s178
      %s182 = sphi 0, %s181
      %s198 = sphi 0, %s182
    $region4: #{tpu_custom_call.1} parent=1 // loop_header_branch
      %19 = sbr.rel (%p17) target = $region8
    $region5: #{tpu_custom_call.1} parent=1 // loop_body
      %s21 = ssub.s32 %s16, 1
      %s22 = ssub.s32 %s16, 2
      %s23 = sadd.s32 %s16, 1
      %s24 = ssub.s32 %s16, %s23
      %p25 = scmp.eq.s32.totalorder %s24, 0
      %s27 = sadd.s32 %s26, 1
      %s28 = scalar_select %p25, %s26, %s27
      %p31 = pneg %p25
      %p32 = scmp.eq.s32.totalorder %s16, 1
      %p33 = por %p31, %p32
      %p34 = scmp.ne.s32.totalorder %s26, %s29
      %p35 = scmp.eq.s32.totalorder %s16, 0
      %p36 = por %p34, %p35
      %p37 = scmp.ne.s32.totalorder %s26, %s29
      %p38 = scmp.eq.s32.totalorder %s21, 1
      %p39 = por %p37, %p38
      %p40 = scmp.ne.s32.totalorder %s29, %s30
      %p41 = scmp.eq.s32.totalorder %s21, 0
      %p42 = por %p40, %p41
      %p43 = scmp.ne.s32.totalorder %s29, %s30
      %p44 = scmp.eq.s32.totalorder %s22, 1
      %p45 = por %p43, %p44
      %p47 = scmp.ne.s32.totalorder %s30, %s46
      %p48 = scmp.eq.s32.totalorder %s22, 0
      %p49 = por %p47, %p48
      %s51 = sadd.s32 %s50, 1
      %p54 = scmp.eq.s32.totalorder %s16, 1
      %p55 = scmp.ne.s32.totalorder %s50, %s52
      %p56 = scmp.eq.s32.totalorder %s16, 0
      %p57 = por %p55, %p56
      %p58 = scmp.ne.s32.totalorder %s50, %s52
      %p59 = scmp.eq.s32.totalorder %s21, 1
      %p60 = por %p58, %p59
      %p61 = scmp.ne.s32.totalorder %s52, %s53
      %p62 = scmp.eq.s32.totalorder %s21, 0
      %p63 = por %p61, %p62
      %p64 = scmp.ne.s32.totalorder %s52, %s53
      %p65 = scmp.eq.s32.totalorder %s22, 1
      %p66 = por %p64, %p65
      %p68 = scmp.ne.s32.totalorder %s53, %s67
      %p69 = scmp.eq.s32.totalorder %s22, 0
      %p70 = por %p68, %p69
      %s72 = sadd.s32 %s71, 1
      %p75 = scmp.eq.s32.totalorder %s16, 1
      %p76 = scmp.ne.s32.totalorder %s71, %s73
      %p77 = scmp.eq.s32.totalorder %s16, 0
      %p78 = por %p76, %p77
      %p79 = scmp.ne.s32.totalorder %s71, %s73
      %p80 = scmp.eq.s32.totalorder %s21, 1
      %p81 = por %p79, %p80
      %p82 = scmp.ne.s32.totalorder %s73, %s74
      %p83 = scmp.eq.s32.totalorder %s21, 0
      %p84 = por %p82, %p83
      %p85 = scmp.ne.s32.totalorder %s73, %s74
      %p86 = scmp.eq.s32.totalorder %s22, 1
      %p87 = por %p85, %p86
      %p89 = scmp.ne.s32.totalorder %s74, %s88
      %p90 = scmp.eq.s32.totalorder %s22, 0
      %p91 = por %p89, %p90
      %s93 = sadd.s32 %s92, 1
      %p96 = scmp.eq.s32.totalorder %s16, 1
      %p97 = scmp.ne.s32.totalorder %s92, %s94
      %p98 = scmp.eq.s32.totalorder %s16, 0
      %p99 = por %p97, %p98
      %p100 = scmp.ne.s32.totalorder %s92, %s94
      %p101 = scmp.eq.s32.totalorder %s21, 1
      %p102 = por %p100, %p101
      %p103 = scmp.ne.s32.totalorder %s94, %s95
      %p104 = scmp.eq.s32.totalorder %s21, 0
      %p105 = por %p103, %p104
      %p106 = scmp.ne.s32.totalorder %s94, %s95
      %p107 = scmp.eq.s32.totalorder %s22, 1
      %p108 = por %p106, %p107
      %p110 = scmp.ne.s32.totalorder %s95, %s109
      %p111 = scmp.eq.s32.totalorder %s22, 0
      %p112 = por %p110, %p111
      %s114 = sadd.s32 %s113, 1
      %p117 = scmp.eq.s32.totalorder %s16, 1
      %p118 = scmp.ne.s32.totalorder %s113, %s115
      %p119 = scmp.eq.s32.totalorder %s16, 0
      %p120 = por %p118, %p119
      %p121 = scmp.ne.s32.totalorder %s113, %s115
      %p122 = scmp.eq.s32.totalorder %s21, 1
      %p123 = por %p121, %p122
      %p124 = scmp.ne.s32.totalorder %s115, %s116
      %p125 = scmp.eq.s32.totalorder %s21, 0
      %p126 = por %p124, %p125
      %p127 = scmp.ne.s32.totalorder %s115, %s116
      %p128 = scmp.eq.s32.totalorder %s22, 1
      %p129 = por %p127, %p128
      %p131 = scmp.ne.s32.totalorder %s116, %s130
      %p132 = scmp.eq.s32.totalorder %s22, 0
      %p133 = por %p131, %p132
      %s135 = sadd.s32 %s134, 1
      %p138 = scmp.eq.s32.totalorder %s16, 1
      %p139 = scmp.ne.s32.totalorder %s134, %s136
      %p140 = scmp.eq.s32.totalorder %s16, 0
      %p141 = por %p139, %p140
      %p142 = scmp.ne.s32.totalorder %s134, %s136
      %p143 = scmp.eq.s32.totalorder %s21, 1
      %p144 = por %p142, %p143
      %p145 = scmp.ne.s32.totalorder %s136, %s137
      %p146 = scmp.eq.s32.totalorder %s21, 0
      %p147 = por %p145, %p146
      %p148 = scmp.ne.s32.totalorder %s136, %s137
      %p149 = scmp.eq.s32.totalorder %s22, 1
      %p150 = por %p148, %p149
      %p152 = scmp.ne.s32.totalorder %s137, %s151
      %p153 = scmp.eq.s32.totalorder %s22, 0
      %p154 = por %p152, %p153
      %s156 = sadd.s32 %s155, 1
      %p159 = scmp.eq.s32.totalorder %s16, 1
      %p160 = scmp.ne.s32.totalorder %s155, %s157
      %p161 = scmp.eq.s32.totalorder %s16, 0
      %p162 = por %p160, %p161
      %p163 = scmp.ne.s32.totalorder %s155, %s157
      %p164 = scmp.eq.s32.totalorder %s21, 1
      %p165 = por %p163, %p164
      %p166 = scmp.ne.s32.totalorder %s157, %s158
      %p167 = scmp.eq.s32.totalorder %s21, 0
      %p168 = por %p166, %p167
      %p169 = scmp.ne.s32.totalorder %s157, %s158
      %p170 = scmp.eq.s32.totalorder %s22, 1
      %p171 = por %p169, %p170
      %p173 = scmp.ne.s32.totalorder %s158, %s172
      %p174 = scmp.eq.s32.totalorder %s22, 0
      %p175 = por %p173, %p174
      %s176 = ssub.s32 %s16, %s23
      %p177 = scmp.eq.s32.totalorder %s176, 0
      %s179 = sadd.s32 %s178, 1
      %s180 = scalar_select %p177, %s178, %s179
      %p183 = pneg %p177
      %p184 = scmp.eq.s32.totalorder %s16, 1
      %p185 = por %p183, %p184
      %p186 = scmp.ne.s32.totalorder %s178, %s181
      %p187 = scmp.eq.s32.totalorder %s16, 0
      %p188 = por %p186, %p187
      %p189 = scmp.ne.s32.totalorder %s178, %s181
      %p190 = scmp.eq.s32.totalorder %s21, 1
      %p191 = por %p189, %p190
      %p192 = scmp.ne.s32.totalorder %s181, %s182
      %p193 = scmp.eq.s32.totalorder %s21, 0
      %p194 = por %p192, %p193
      %p195 = scmp.ne.s32.totalorder %s181, %s182
      %p196 = scmp.eq.s32.totalorder %s22, 1
      %p197 = por %p195, %p196
      %p199 = scmp.ne.s32.totalorder %s182, %s198
      %p200 = scmp.eq.s32.totalorder %s22, 0
      %p201 = por %p199, %p200
      %p202 = scmp.le.s32.totalorder 1, %s16
      %p203 = scmp.lt.s32.totalorder %s16, 3
      %p204 = pnand %p202, %p203
      %p205 = pneg %p204
      // Predicated region
      $region9: #{tpu_custom_call.1} parent=5 // pred_check
        _
      $region10: #{tpu_custom_call.1} parent=5 // pred_check_branch
        %207 = sbr.rel (%p204) target = $region12
      $region11: #{tpu_custom_call.1} parent=5 // pred_region
        %s208 = ssub.s32 %s16, 1
        // Predicated region
        $region13: #{tpu_custom_call.1} parent=11 // pred_check
          %p209 = pneg %p63
        $region14: #{tpu_custom_call.1} parent=11 // pred_check_branch
          %211 = sbr.rel (%p209) target = $region16
        $region15: #{tpu_custom_call.1} parent=11 // pred_region
          _
        $region16: #{tpu_custom_call.1} parent=11 // pred_fallthru
          _
        // Predicated region
        $region17: #{tpu_custom_call.1} parent=11 // pred_check
          %p212 = pneg %p84
        $region18: #{tpu_custom_call.1} parent=11 // pred_check_branch
          %214 = sbr.rel (%p212) target = $region20
        $region19: #{tpu_custom_call.1} parent=11 // pred_region
          _
        $region20: #{tpu_custom_call.1} parent=11 // pred_fallthru
          _
        // Predicated region
        $region21: #{tpu_custom_call.1} parent=11 // pred_check
          %p215 = pneg %p105
        $region22: #{tpu_custom_call.1} parent=11 // pred_check_branch
          %217 = sbr.rel (%p215) target = $region24
        $region23: #{tpu_custom_call.1} parent=11 // pred_region
          _
        $region24: #{tpu_custom_call.1} parent=11 // pred_fallthru
          _
        // Predicated region
        $region25: #{tpu_custom_call.1} parent=11 // pred_check
          %p218 = pneg %p126
        $region26: #{tpu_custom_call.1} parent=11 // pred_check_branch
          %220 = sbr.rel (%p218) target = $region28
        $region27: #{tpu_custom_call.1} parent=11 // pred_region
          _
        $region28: #{tpu_custom_call.1} parent=11 // pred_fallthru
          _
        // Predicated region
        $region29: #{tpu_custom_call.1} parent=11 // pred_check
          %p221 = pneg %p147
        $region30: #{tpu_custom_call.1} parent=11 // pred_check_branch
          %223 = sbr.rel (%p221) target = $region32
        $region31: #{tpu_custom_call.1} parent=11 // pred_region
          _
        $region32: #{tpu_custom_call.1} parent=11 // pred_fallthru
          _
        // Predicated region
        $region33: #{tpu_custom_call.1} parent=11 // pred_check
          %p224 = pneg %p168
        $region34: #{tpu_custom_call.1} parent=11 // pred_check_branch
          %226 = sbr.rel (%p224) target = $region36
        $region35: #{tpu_custom_call.1} parent=11 // pred_region
          _
        $region36: #{tpu_custom_call.1} parent=11 // pred_fallthru
          _
      $region12: #{tpu_custom_call.1} parent=5 // pred_fallthru
        _
      %p227 = scmp.lt.s32.totalorder %s16, 2
      // Predicated region
      $region37: #{tpu_custom_call.1} parent=5 // pred_check
        %p228 = pneg %p227
      $region38: #{tpu_custom_call.1} parent=5 // pred_check_branch
        %230 = sbr.rel (%p228) target = $region40
      $region39: #{tpu_custom_call.1} parent=5 // pred_region
        // Predicated region
        $region41: #{tpu_custom_call.1} parent=39 // pred_check
          %p231 = pneg %p36
        $region42: #{tpu_custom_call.1} parent=39 // pred_check_branch
          %233 = sbr.rel (%p231) target = $region44
        $region43: #{tpu_custom_call.1} parent=39 // pred_region
          %p234 = scmp.lt.s32.totalorder %s16, 1
          %s235 = scalar_select %p234, %s16, 1
          %s236 = smul.addr %s235, 4
          %s237 = smul.addr %s236, 8
          %s238 = scalar_lea.vmem %s0, %s237
        $region44: #{tpu_custom_call.1} parent=39 // pred_fallthru
          _
      $region40: #{tpu_custom_call.1} parent=5 // pred_fallthru
        _
      %p239 = scmp.le.s32.totalorder 1, %s16
      %p240 = scmp.lt.s32.totalorder %s16, 3
      %p241 = pnand %p239, %p240
      %p242 = pneg %p241
      // Predicated region
      $region45: #{tpu_custom_call.1} parent=5 // pred_check
        _
      $region46: #{tpu_custom_call.1} parent=5 // pred_check_branch
        %244 = sbr.rel (%p241) target = $region48
      $region47: #{tpu_custom_call.1} parent=5 // pred_region
        %s245 = ssub.s32 %s16, 1
        %p246 = scmp.lt.s32.totalorder %s21, 1
        %s247 = scalar_select %p246, %s21, 1
        %s248 = smul.addr %s247, 4
        %s249 = smul.addr %s248, 8
        %s250 = scalar_lea.vmem %s0, %s249
        %p251 = pneg %p42
        %p252 = pneg %p39
        %p253 = pneg %p63
        %p254 = pneg %p60
        %p255 = pneg %p84
        %p256 = pneg %p81
        %p257 = pneg %p105
        %p258 = pneg %p102
        %p259 = pneg %p126
        %p260 = pneg %p123
        %p261 = pneg %p147
        %p262 = pneg %p144
        %p263 = pneg %p168
        %p264 = pneg %p165
        %p265 = pneg %p194
        %p266 = pneg %p191
        %s267 = sand.u32 %s181, 1
        %s268 = scalar_lea.sflag [#allocation3], %s267
        %s269 = sand.u32 %s181, 1
        %s270 = smul.addr %s269, 32
        %s271 = scalar_lea.vmem [#allocation2], %s270
        %p272 = scmp.lt.s32.totalorder %s21, 1
        %s273 = scalar_select %p272, %s21, 1
        %s274 = smul.addr %s273, 4
        %s275 = smul.addr %s274, 8
        %s276 = scalar_lea.vmem %s0, %s275
        %v277 = vlaneseq
        %v278 = vand.u32 %v277, 127
        %v279 = vadd.s32 %v278, 128
        %v280 = vld [vmem:[%s276] sm:$0xff]
        %v281 = vld [vmem:[%s276 + $0x8] sm:$0xff]
        %v282 = vld [vmem:[%s276 + $0x10] sm:$0xff]
        %v283 = vld [vmem:[%s276 + $0x18] sm:$0xff]
        %284 = vrot.lane.b32.xlu0 %v280, 2
        %v285 = vpop.permute.xlu0 %284
        %286 = vrot.lane.b32.xlu0 %v282, 2
        %v287 = vpop.permute.xlu0 %286
        %288 = vrot.lane.b32.xlu0 %v281, 2
        %v289 = vpop.permute.xlu0 %288
        %290 = vrot.lane.b32.xlu0 %v283, 2
        %v291 = vpop.permute.xlu0 %290
        %vm292 = vcmp.lt.s32.totalorder %v278, 2
        %v293 = vsel %vm292, %v285, %v289
        %v294 = vsel %vm292, %v287, %v291
        %v295 = vsel %vm292, %v289, %v285
        %v296 = vsel %vm292, %v291, %v287
        %v297 = vadd.s32 %v278, 4294967294
        %v298 = vadd.s32 %v279, 4294967294
        %vm299 = vcmp.ge.s32.totalorder %v297, 0
        %vm300 = vcmp.ge.s32.totalorder %v298, 0
        %vm301 = vcmp.lt.s32.totalorder %v297, 256
        %vm302 = vcmp.lt.s32.totalorder %v298, 256
        %vm303 = vmand %vm299, %vm301
        %vm304 = vmand %vm300, %vm302
        %v305 = vsel %vm303, %v295, 0.0
        %v306 = vsel %vm304, %v293, 0.0
        %v307 = vsel %vm303, %v296, 0.0
        %v308 = vsel %vm304, %v294, 0.0
        %v309 = vld [vmem:[%s1] sm:$0xff]
        %v310 = vld [vmem:[%s1 + $0x8] sm:$0xff]
        %312 = vset.pattern.permute.xlu0 0
        %313 = vperm.xlu0 %312, %v309
        %v314 = vpop.permute.xlu0 %313
        %317 = vset.pattern.permute.xlu0 0
        %318 = vperm.xlu0 %317, %v310
        %v319 = vpop.permute.xlu0 %318
        %v321 = vmul.f32 %v314, %v305
        %v322 = vmul.f32 %v314, %v306
        %v323 = vmul.f32 %v319, %v307
        %v324 = vmul.f32 %v319, %v308
        %v325 = vadd.f32 %v321, 0.0
        %v326 = vadd.f32 %v322, 0.0
        %v327 = vadd.f32 %v323, 0.0
        %v328 = vadd.f32 %v324, 0.0
        %329 = vrot.lane.b32.xlu0 %v280, 1
        %v330 = vpop.permute.xlu0 %329
        %331 = vrot.lane.b32.xlu0 %v282, 1
        %v332 = vpop.permute.xlu0 %331
        %333 = vrot.lane.b32.xlu0 %v281, 1
        %v334 = vpop.permute.xlu0 %333
        %335 = vrot.lane.b32.xlu0 %v283, 1
        %v336 = vpop.permute.xlu0 %335
        %vm337 = vcmp.lt.s32.totalorder %v278, 1
        %v338 = vsel %vm337, %v330, %v334
        %v339 = vsel %vm337, %v332, %v336
        %v340 = vsel %vm337, %v334, %v330
        %v341 = vsel %vm337, %v336, %v332
        %v342 = vadd.s32 %v278, 4294967295
        %v343 = vadd.s32 %v279, 4294967295
        %vm344 = vcmp.ge.s32.totalorder %v342, 0
        %vm345 = vcmp.ge.s32.totalorder %v343, 0
        %vm346 = vcmp.lt.s32.totalorder %v342, 256
        %vm347 = vcmp.lt.s32.totalorder %v343, 256
        %vm348 = vmand %vm344, %vm346
        %vm349 = vmand %vm345, %vm347
        %v350 = vsel %vm348, %v340, 0.0
        %v351 = vsel %vm349, %v338, 0.0
        %v352 = vsel %vm348, %v341, 0.0
        %v353 = vsel %vm349, %v339, 0.0
        %354 = vset.pattern.permute.xlu0 1
        %355 = vperm.xlu0 %354, %v309
        %v356 = vpop.permute.xlu0 %355
        %358 = vset.pattern.permute.xlu0 1
        %359 = vperm.xlu0 %358, %v310
        %v360 = vpop.permute.xlu0 %359
        %v362 = vmul.f32 %v356, %v350
        %v363 = vmul.f32 %v356, %v351
        %v364 = vmul.f32 %v360, %v352
        %v365 = vmul.f32 %v360, %v353
        %v366 = vadd.f32 %v325, %v362
        %v367 = vadd.f32 %v326, %v363
        %v368 = vadd.f32 %v327, %v364
        %v369 = vadd.f32 %v328, %v365
        %370 = vset.pattern.permute.xlu0 2
        %371 = vperm.xlu0 %370, %v309
        %v372 = vpop.permute.xlu0 %371
        %374 = vset.pattern.permute.xlu0 2
        %375 = vperm.xlu0 %374, %v310
        %v376 = vpop.permute.xlu0 %375
        %v378 = vmul.f32 %v372, %v280
        %v379 = vmul.f32 %v372, %v281
        %v380 = vmul.f32 %v376, %v282
        %v381 = vmul.f32 %v376, %v283
        %v382 = vadd.f32 %v366, %v378
        %v383 = vadd.f32 %v367, %v379
        %v384 = vadd.f32 %v368, %v380
        %v385 = vadd.f32 %v369, %v381
        %386 = vrot.lane.b32.xlu0 %v280, 127
        %v387 = vpop.permute.xlu0 %386
        %388 = vrot.lane.b32.xlu0 %v282, 127
        %v389 = vpop.permute.xlu0 %388
        %390 = vrot.lane.b32.xlu0 %v281, 127
        %v391 = vpop.permute.xlu0 %390
        %392 = vrot.lane.b32.xlu0 %v283, 127
        %v393 = vpop.permute.xlu0 %392
        %vm394 = vcmp.lt.s32.totalorder %v278, 127
        %v395 = vsel %vm394, %v387, %v391
        %v396 = vsel %vm394, %v389, %v393
        %v397 = vsel %vm394, %v391, %v387
        %v398 = vsel %vm394, %v393, %v389
        %v399 = vadd.s32 %v278, 1
        %v400 = vadd.s32 %v279, 1
        %vm401 = vcmp.ge.s32.totalorder %v399, 0
        %vm402 = vcmp.ge.s32.totalorder %v400, 0
        %vm403 = vcmp.lt.s32.totalorder %v399, 256
        %vm404 = vcmp.lt.s32.totalorder %v400, 256
        %vm405 = vmand %vm401, %vm403
        %vm406 = vmand %vm402, %vm404
        %v407 = vsel %vm405, %v395, 0.0
        %v408 = vsel %vm406, %v397, 0.0
        %v409 = vsel %vm405, %v396, 0.0
        %v410 = vsel %vm406, %v398, 0.0
        %411 = vset.pattern.permute.xlu0 3
        %412 = vperm.xlu0 %411, %v309
        %v413 = vpop.permute.xlu0 %412
        %415 = vset.pattern.permute.xlu0 3
        %416 = vperm.xlu0 %415, %v310
        %v417 = vpop.permute.xlu0 %416
        %v419 = vmul.f32 %v413, %v407
        %v420 = vmul.f32 %v413, %v408
        %v421 = vmul.f32 %v417, %v409
        %v422 = vmul.f32 %v417, %v410
        %v423 = vadd.f32 %v382, %v419
        %v424 = vadd.f32 %v383, %v420
        %v425 = vadd.f32 %v384, %v421
        %v426 = vadd.f32 %v385, %v422
        %427 = vrot.lane.b32.xlu0 %v280, 126
        %v428 = vpop.permute.xlu0 %427
        %429 = vrot.lane.b32.xlu0 %v282, 126
        %v430 = vpop.permute.xlu0 %429
        %431 = vrot.lane.b32.xlu0 %v281, 126
        %v432 = vpop.permute.xlu0 %431
        %433 = vrot.lane.b32.xlu0 %v283, 126
        %v434 = vpop.permute.xlu0 %433
        %vm435 = vcmp.lt.s32.totalorder %v278, 126
        %v436 = vsel %vm435, %v428, %v432
        %v437 = vsel %vm435, %v430, %v434
        %v438 = vsel %vm435, %v432, %v428
        %v439 = vsel %vm435, %v434, %v430
        %v440 = vadd.s32 %v278, 2
        %v441 = vadd.s32 %v279, 2
        %vm442 = vcmp.ge.s32.totalorder %v440, 0
        %vm443 = vcmp.ge.s32.totalorder %v441, 0
        %vm444 = vcmp.lt.s32.totalorder %v440, 256
        %vm445 = vcmp.lt.s32.totalorder %v441, 256
        %vm446 = vmand %vm442, %vm444
        %vm447 = vmand %vm443, %vm445
        %v448 = vsel %vm446, %v436, 0.0
        %v449 = vsel %vm447, %v438, 0.0
        %v450 = vsel %vm446, %v437, 0.0
        %v451 = vsel %vm447, %v439, 0.0
        %452 = vset.pattern.permute.xlu0 4
        %453 = vperm.xlu0 %452, %v309
        %v454 = vpop.permute.xlu0 %453
        %456 = vset.pattern.permute.xlu0 4
        %457 = vperm.xlu0 %456, %v310
        %v458 = vpop.permute.xlu0 %457
        %v460 = vmul.f32 %v454, %v448
        %v461 = vmul.f32 %v454, %v449
        %v462 = vmul.f32 %v458, %v450
        %v463 = vmul.f32 %v458, %v451
        %v464 = vadd.f32 %v423, %v460
        %v465 = vadd.f32 %v424, %v461
        %v466 = vadd.f32 %v425, %v462
        %v467 = vadd.f32 %v426, %v463
        %v468 = vld [vmem:[%s2] sm:$0xff]
        %v469 = vld [vmem:[%s2 + $0x8] sm:$0xff]
        %471 = vset.pattern.permute.xlu0 0
        %472 = vperm.xlu0 %471, %v468
        %v473 = vpop.permute.xlu0 %472
        %476 = vset.pattern.permute.xlu0 0
        %477 = vperm.xlu0 %476, %v469
        %v478 = vpop.permute.xlu0 %477
        %v480 = vadd.f32 %v464, %v473
        %v481 = vadd.f32 %v465, %v473
        %v482 = vadd.f32 %v466, %v478
        %v483 = vadd.f32 %v467, %v478
        %484 = vrot.lane.b32.xlu0 %v480, 3
        %v485 = vpop.permute.xlu0 %484
        %486 = vrot.lane.b32.xlu0 %v482, 3
        %v487 = vpop.permute.xlu0 %486
        %488 = vrot.lane.b32.xlu0 %v481, 3
        %v489 = vpop.permute.xlu0 %488
        %490 = vrot.lane.b32.xlu0 %v483, 3
        %v491 = vpop.permute.xlu0 %490
        %vm492 = vcmp.lt.s32.totalorder %v278, 3
        %v493 = vsel %vm492, %v485, %v489
        %v494 = vsel %vm492, %v487, %v491
        %v495 = vsel %vm492, %v489, %v485
        %v496 = vsel %vm492, %v491, %v487
        %v497 = vadd.s32 %v278, 4294967293
        %v498 = vadd.s32 %v279, 4294967293
        %vm499 = vcmp.ge.s32.totalorder %v497, 0
        %vm500 = vcmp.ge.s32.totalorder %v498, 0
        %vm501 = vcmp.lt.s32.totalorder %v497, 256
        %vm502 = vcmp.lt.s32.totalorder %v498, 256
        %vm503 = vmand %vm499, %vm501
        %vm504 = vmand %vm500, %vm502
        %v505 = vsel %vm503, %v495, 0.0
        %v506 = vsel %vm504, %v493, 0.0
        %v507 = vsel %vm503, %v496, 0.0
        %v508 = vsel %vm504, %v494, 0.0
        %v509 = vld [vmem:[%s3] sm:$0xff]
        %v510 = vld [vmem:[%s3 + $0x8] sm:$0xff]
        %512 = vset.pattern.permute.xlu0 0
        %513 = vperm.xlu0 %512, %v509
        %v514 = vpop.permute.xlu0 %513
        %517 = vset.pattern.permute.xlu0 0
        %518 = vperm.xlu0 %517, %v510
        %v519 = vpop.permute.xlu0 %518
        %v521 = vmul.f32 %v514, %v505
        %v522 = vmul.f32 %v514, %v506
        %v523 = vmul.f32 %v519, %v507
        %v524 = vmul.f32 %v519, %v508
        %v525 = vadd.f32 %v521, 0.0
        %v526 = vadd.f32 %v522, 0.0
        %v527 = vadd.f32 %v523, 0.0
        %v528 = vadd.f32 %v524, 0.0
        %529 = vset.pattern.permute.xlu0 1
        %530 = vperm.xlu0 %529, %v509
        %v531 = vpop.permute.xlu0 %530
        %533 = vset.pattern.permute.xlu0 1
        %534 = vperm.xlu0 %533, %v510
        %v535 = vpop.permute.xlu0 %534
        %v537 = vmul.f32 %v531, %v480
        %v538 = vmul.f32 %v531, %v481
        %v539 = vmul.f32 %v535, %v482
        %v540 = vmul.f32 %v535, %v483
        %v541 = vadd.f32 %v525, %v537
        %v542 = vadd.f32 %v526, %v538
        %v543 = vadd.f32 %v527, %v539
        %v544 = vadd.f32 %v528, %v540
        %545 = vrot.lane.b32.xlu0 %v480, 125
        %v546 = vpop.permute.xlu0 %545
        %547 = vrot.lane.b32.xlu0 %v482, 125
        %v548 = vpop.permute.xlu0 %547
        %549 = vrot.lane.b32.xlu0 %v481, 125
        %v550 = vpop.permute.xlu0 %549
        %551 = vrot.lane.b32.xlu0 %v483, 125
        %v552 = vpop.permute.xlu0 %551
        %vm553 = vcmp.lt.s32.totalorder %v278, 125
        %v554 = vsel %vm553, %v546, %v550
        %v555 = vsel %vm553, %v548, %v552
        %v556 = vsel %vm553, %v550, %v546
        %v557 = vsel %vm553, %v552, %v548
        %v558 = vadd.s32 %v278, 3
        %v559 = vadd.s32 %v279, 3
        %vm560 = vcmp.ge.s32.totalorder %v558, 0
        %vm561 = vcmp.ge.s32.totalorder %v559, 0
        %vm562 = vcmp.lt.s32.totalorder %v558, 256
        %vm563 = vcmp.lt.s32.totalorder %v559, 256
        %vm564 = vmand %vm560, %vm562
        %vm565 = vmand %vm561, %vm563
        %v566 = vsel %vm564, %v554, 0.0
        %v567 = vsel %vm565, %v556, 0.0
        %v568 = vsel %vm564, %v555, 0.0
        %v569 = vsel %vm565, %v557, 0.0
        %570 = vset.pattern.permute.xlu0 2
        %571 = vperm.xlu0 %570, %v509
        %v572 = vpop.permute.xlu0 %571
        %574 = vset.pattern.permute.xlu0 2
        %575 = vperm.xlu0 %574, %v510
        %v576 = vpop.permute.xlu0 %575
        %v578 = vmul.f32 %v572, %v566
        %v579 = vmul.f32 %v572, %v567
        %v580 = vmul.f32 %v576, %v568
        %v581 = vmul.f32 %v576, %v569
        %v582 = vadd.f32 %v541, %v578
        %v583 = vadd.f32 %v542, %v579
        %v584 = vadd.f32 %v543, %v580
        %v585 = vadd.f32 %v544, %v581
        %v586 = vld [vmem:[%s4] sm:$0xff]
        %v587 = vld [vmem:[%s4 + $0x8] sm:$0xff]
        %589 = vset.pattern.permute.xlu0 0
        %590 = vperm.xlu0 %589, %v586
        %v591 = vpop.permute.xlu0 %590
        %594 = vset.pattern.permute.xlu0 0
        %595 = vperm.xlu0 %594, %v587
        %v596 = vpop.permute.xlu0 %595
        %v598 = vadd.f32 %v582, %v591
        %v599 = vadd.f32 %v583, %v591
        %v600 = vadd.f32 %v584, %v596
        %v601 = vadd.f32 %v585, %v596
        %v602 = vld [vmem:[%s5] sm:$0xff]
        %v603 = vld [vmem:[%s5 + $0x8] sm:$0xff]
        %v604 = vld [vmem:[%s6] sm:$0xff]
        %v605 = vld [vmem:[%s6 + $0x8] sm:$0xff]
        %607 = vset.pattern.permute.xlu0 0
        %608 = vperm.xlu0 %607, %v604
        %v609 = vpop.permute.xlu0 %608
        %612 = vset.pattern.permute.xlu0 0
        %613 = vperm.xlu0 %612, %v605
        %v614 = vpop.permute.xlu0 %613
        %vm616 = vcmask 130048
        %v618 = vsel %vm616, %v602, 0
        %v621 = vsel %vm616, %v603, 0
        %623 = vmatpush.msra.mxu0 0.0
        %624 = vmatpush.msra.mxu0 0.0
        %625 = vmatpush.msra.mxu0 0.0
        %626 = vmatpush.msra.mxu0 0.0
        %627 = vmatpush.msra.mxu0 0.0
        %628 = vmatpush.msra.mxu0 0.0
        %629 = vmatpush.msra.mxu0 0.0
        %630 = vmatpush.msra.mxu0 0.0
        %631 = vmatpush.msra.mxu0 0.0
        %632 = vmatpush.msra.mxu0 0.0
        %633 = vmatpush.msra.mxu0 0.0
        %634 = vmatpush.msra.mxu0 0.0
        %635 = vmatpush.msra.mxu0 0.0
        %636 = vmatpush.msra.mxu0 0.0
        %v637 = vand.u32 %v600, 4294901760
        %638 = vmatpush.msra.mxu0 %v637
        %v639 = vand.u32 %v598, 4294901760
        %640 = vmatpush.msra.mxu0 %v639
        %v641 = vand.u32 %v618, 4294901760
        %v642 = vsub.f32 %v618, %v641
        %v643 = vand.u32 %v642, 4294901760
        %v644 = vsub.f32 %v642, %v643
        %v645 = vand.u32 %v644, 4294901760
        %646 = vmatmul.f32.gmra.mxu0 %v645
        %v647 = vpop.f32.mrf.mxu0
        %v648 = vadd.f32 %v609, %v647
        %v649 = vand.u32 %v621, 4294901760
        %v650 = vsub.f32 %v621, %v649
        %v651 = vand.u32 %v650, 4294901760
        %v652 = vsub.f32 %v650, %v651
        %v653 = vand.u32 %v652, 4294901760
        %654 = vmatmul.f32.gmra.mxu0 %v653
        %v655 = vpop.f32.mrf.mxu0
        %v656 = vadd.f32 %v614, %v655
        %657 = vdwg.mxu0
        %658 = vmatpush.msra.mxu0 0.0
        %659 = vmatpush.msra.mxu0 0.0
        %660 = vmatpush.msra.mxu0 0.0
        %661 = vmatpush.msra.mxu0 0.0
        %662 = vmatpush.msra.mxu0 0.0
        %663 = vmatpush.msra.mxu0 0.0
        %664 = vmatpush.msra.mxu0 0.0
        %665 = vmatpush.msra.mxu0 0.0
        %666 = vmatpush.msra.mxu0 0.0
        %667 = vmatpush.msra.mxu0 0.0
        %668 = vmatpush.msra.mxu0 0.0
        %669 = vmatpush.msra.mxu0 0.0
        %670 = vmatpush.msra.mxu0 0.0
        %671 = vmatpush.msra.mxu0 0.0
        %v672 = vand.u32 %v600, 4294901760
        %v673 = vsub.f32 %v600, %v672
        %v674 = vand.u32 %v673, 4294901760
        %v675 = vsub.f32 %v673, %v674
        %v676 = vand.u32 %v675, 4294901760
        %677 = vmatpush.msra.mxu0 %v676
        %v678 = vand.u32 %v598, 4294901760
        %v679 = vsub.f32 %v598, %v678
        %v680 = vand.u32 %v679, 4294901760
        %v681 = vsub.f32 %v679, %v680
        %v682 = vand.u32 %v681, 4294901760
        %683 = vmatpush.msra.mxu0 %v682
        %v684 = vand.u32 %v618, 4294901760
        %685 = vmatmul.f32.gmra.mxu0 %v684
        %v686 = vpop.f32.mrf.mxu0
        %v687 = vadd.f32 %v648, %v686
        %v688 = vand.u32 %v621, 4294901760
        %689 = vmatmul.f32.gmra.mxu0 %v688
        %v690 = vpop.f32.mrf.mxu0
        %v691 = vadd.f32 %v656, %v690
        %692 = vdwg.mxu0
        %693 = vmatpush.msra.mxu0 0.0
        %694 = vmatpush.msra.mxu0 0.0
        %695 = vmatpush.msra.mxu0 0.0
        %696 = vmatpush.msra.mxu0 0.0
        %697 = vmatpush.msra.mxu0 0.0
        %698 = vmatpush.msra.mxu0 0.0
        %699 = vmatpush.msra.mxu0 0.0
        %700 = vmatpush.msra.mxu0 0.0
        %701 = vmatpush.msra.mxu0 0.0
        %702 = vmatpush.msra.mxu0 0.0
        %703 = vmatpush.msra.mxu0 0.0
        %704 = vmatpush.msra.mxu0 0.0
        %705 = vmatpush.msra.mxu0 0.0
        %706 = vmatpush.msra.mxu0 0.0
        %v707 = vand.u32 %v600, 4294901760
        %v708 = vsub.f32 %v600, %v707
        %709 = vmatpush.msra.mxu0 %v708
        %v710 = vand.u32 %v598, 4294901760
        %v711 = vsub.f32 %v598, %v710
        %712 = vmatpush.msra.mxu0 %v711
        %v713 = vand.u32 %v618, 4294901760
        %v714 = vsub.f32 %v618, %v713
        %715 = vmatmul.f32.gmra.mxu0 %v714
        %v716 = vpop.f32.mrf.mxu0
        %v717 = vadd.f32 %v687, %v716
        %v718 = vand.u32 %v621, 4294901760
        %v719 = vsub.f32 %v621, %v718
        %720 = vmatmul.f32.gmra.mxu0 %v719
        %v721 = vpop.f32.mrf.mxu0
        %v722 = vadd.f32 %v691, %v721
        %723 = vdwg.mxu0
        %724 = vmatpush.msra.mxu0 0.0
        %725 = vmatpush.msra.mxu0 0.0
        %726 = vmatpush.msra.mxu0 0.0
        %727 = vmatpush.msra.mxu0 0.0
        %728 = vmatpush.msra.mxu0 0.0
        %729 = vmatpush.msra.mxu0 0.0
        %730 = vmatpush.msra.mxu0 0.0
        %731 = vmatpush.msra.mxu0 0.0
        %732 = vmatpush.msra.mxu0 0.0
        %733 = vmatpush.msra.mxu0 0.0
        %734 = vmatpush.msra.mxu0 0.0
        %735 = vmatpush.msra.mxu0 0.0
        %736 = vmatpush.msra.mxu0 0.0
        %737 = vmatpush.msra.mxu0 0.0
        %v738 = vand.u32 %v600, 4294901760
        %739 = vmatpush.msra.mxu0 %v738
        %v740 = vand.u32 %v598, 4294901760
        %741 = vmatpush.msra.mxu0 %v740
        %v742 = vand.u32 %v618, 4294901760
        %v743 = vsub.f32 %v618, %v742
        %v744 = vand.u32 %v743, 4294901760
        %745 = vmatmul.f32.gmra.mxu0 %v744
        %v746 = vpop.f32.mrf.mxu0
        %v747 = vadd.f32 %v717, %v746
        %v748 = vand.u32 %v621, 4294901760
        %v749 = vsub.f32 %v621, %v748
        %v750 = vand.u32 %v749, 4294901760
        %751 = vmatmul.f32.gmra.mxu0 %v750
        %v752 = vpop.f32.mrf.mxu0
        %v753 = vadd.f32 %v722, %v752
        %754 = vdwg.mxu0
        %755 = vmatpush.msra.mxu0 0.0
        %756 = vmatpush.msra.mxu0 0.0
        %757 = vmatpush.msra.mxu0 0.0
        %758 = vmatpush.msra.mxu0 0.0
        %759 = vmatpush.msra.mxu0 0.0
        %760 = vmatpush.msra.mxu0 0.0
        %761 = vmatpush.msra.mxu0 0.0
        %762 = vmatpush.msra.mxu0 0.0
        %763 = vmatpush.msra.mxu0 0.0
        %764 = vmatpush.msra.mxu0 0.0
        %765 = vmatpush.msra.mxu0 0.0
        %766 = vmatpush.msra.mxu0 0.0
        %767 = vmatpush.msra.mxu0 0.0
        %768 = vmatpush.msra.mxu0 0.0
        %v769 = vand.u32 %v600, 4294901760
        %v770 = vsub.f32 %v600, %v769
        %v771 = vand.u32 %v770, 4294901760
        %772 = vmatpush.msra.mxu0 %v771
        %v773 = vand.u32 %v598, 4294901760
        %v774 = vsub.f32 %v598, %v773
        %v775 = vand.u32 %v774, 4294901760
        %776 = vmatpush.msra.mxu0 %v775
        %v777 = vand.u32 %v618, 4294901760
        %778 = vmatmul.f32.gmra.mxu0 %v777
        %v779 = vpop.f32.mrf.mxu0
        %v780 = vadd.f32 %v747, %v779
        %v781 = vand.u32 %v621, 4294901760
        %782 = vmatmul.f32.gmra.mxu0 %v781
        %v783 = vpop.f32.mrf.mxu0
        %v784 = vadd.f32 %v753, %v783
        %785 = vdwg.mxu0
        %786 = vmatpush.msra.mxu0 0.0
        %787 = vmatpush.msra.mxu0 0.0
        %788 = vmatpush.msra.mxu0 0.0
        %789 = vmatpush.msra.mxu0 0.0
        %790 = vmatpush.msra.mxu0 0.0
        %791 = vmatpush.msra.mxu0 0.0
        %792 = vmatpush.msra.mxu0 0.0
        %793 = vmatpush.msra.mxu0 0.0
        %794 = vmatpush.msra.mxu0 0.0
        %795 = vmatpush.msra.mxu0 0.0
        %796 = vmatpush.msra.mxu0 0.0
        %797 = vmatpush.msra.mxu0 0.0
        %798 = vmatpush.msra.mxu0 0.0
        %799 = vmatpush.msra.mxu0 0.0
        %v800 = vand.u32 %v600, 4294901760
        %801 = vmatpush.msra.mxu0 %v800
        %v802 = vand.u32 %v598, 4294901760
        %803 = vmatpush.msra.mxu0 %v802
        %v804 = vand.u32 %v618, 4294901760
        %805 = vmatmul.f32.gmra.mxu0 %v804
        %v806 = vpop.f32.mrf.mxu0
        %v807 = vadd.f32 %v780, %v806
        %v808 = vand.u32 %v621, 4294901760
        %809 = vmatmul.f32.gmra.mxu0 %v808
        %v810 = vpop.f32.mrf.mxu0
        %v811 = vadd.f32 %v784, %v810
        %812 = vdwg.mxu0
        %813 = vmatpush.msra.mxu0 0.0
        %814 = vmatpush.msra.mxu0 0.0
        %815 = vmatpush.msra.mxu0 0.0
        %816 = vmatpush.msra.mxu0 0.0
        %817 = vmatpush.msra.mxu0 0.0
        %818 = vmatpush.msra.mxu0 0.0
        %819 = vmatpush.msra.mxu0 0.0
        %820 = vmatpush.msra.mxu0 0.0
        %821 = vmatpush.msra.mxu0 0.0
        %822 = vmatpush.msra.mxu0 0.0
        %823 = vmatpush.msra.mxu0 0.0
        %824 = vmatpush.msra.mxu0 0.0
        %825 = vmatpush.msra.mxu0 0.0
        %826 = vmatpush.msra.mxu0 0.0
        %v827 = vand.u32 %v601, 4294901760
        %828 = vmatpush.msra.mxu0 %v827
        %v829 = vand.u32 %v599, 4294901760
        %830 = vmatpush.msra.mxu0 %v829
        %v831 = vand.u32 %v618, 4294901760
        %v832 = vsub.f32 %v618, %v831
        %v833 = vand.u32 %v832, 4294901760
        %v834 = vsub.f32 %v832, %v833
        %v835 = vand.u32 %v834, 4294901760
        %836 = vmatmul.f32.gmra.mxu0 %v835
        %v837 = vpop.f32.mrf.mxu0
        %v838 = vadd.f32 %v609, %v837
        %v839 = vand.u32 %v621, 4294901760
        %v840 = vsub.f32 %v621, %v839
        %v841 = vand.u32 %v840, 4294901760
        %v842 = vsub.f32 %v840, %v841
        %v843 = vand.u32 %v842, 4294901760
        %844 = vmatmul.f32.gmra.mxu0 %v843
        %v845 = vpop.f32.mrf.mxu0
        %v846 = vadd.f32 %v614, %v845
        %847 = vdwg.mxu0
        %848 = vmatpush.msra.mxu0 0.0
        %849 = vmatpush.msra.mxu0 0.0
        %850 = vmatpush.msra.mxu0 0.0
        %851 = vmatpush.msra.mxu0 0.0
        %852 = vmatpush.msra.mxu0 0.0
        %853 = vmatpush.msra.mxu0 0.0
        %854 = vmatpush.msra.mxu0 0.0
        %855 = vmatpush.msra.mxu0 0.0
        %856 = vmatpush.msra.mxu0 0.0
        %857 = vmatpush.msra.mxu0 0.0
        %858 = vmatpush.msra.mxu0 0.0
        %859 = vmatpush.msra.mxu0 0.0
        %860 = vmatpush.msra.mxu0 0.0
        %861 = vmatpush.msra.mxu0 0.0
        %v862 = vand.u32 %v601, 4294901760
        %v863 = vsub.f32 %v601, %v862
        %v864 = vand.u32 %v863, 4294901760
        %v865 = vsub.f32 %v863, %v864
        %v866 = vand.u32 %v865, 4294901760
        %867 = vmatpush.msra.mxu0 %v866
        %v868 = vand.u32 %v599, 4294901760
        %v869 = vsub.f32 %v599, %v868
        %v870 = vand.u32 %v869, 4294901760
        %v871 = vsub.f32 %v869, %v870
        %v872 = vand.u32 %v871, 4294901760
        %873 = vmatpush.msra.mxu0 %v872
        %v874 = vand.u32 %v618, 4294901760
        %875 = vmatmul.f32.gmra.mxu0 %v874
        %v876 = vpop.f32.mrf.mxu0
        %v877 = vadd.f32 %v838, %v876
        %v878 = vand.u32 %v621, 4294901760
        %879 = vmatmul.f32.gmra.mxu0 %v878
        %v880 = vpop.f32.mrf.mxu0
        %v881 = vadd.f32 %v846, %v880
        %882 = vdwg.mxu0
        %883 = vmatpush.msra.mxu0 0.0
        %884 = vmatpush.msra.mxu0 0.0
        %885 = vmatpush.msra.mxu0 0.0
        %886 = vmatpush.msra.mxu0 0.0
        %887 = vmatpush.msra.mxu0 0.0
        %888 = vmatpush.msra.mxu0 0.0
        %889 = vmatpush.msra.mxu0 0.0
        %890 = vmatpush.msra.mxu0 0.0
        %891 = vmatpush.msra.mxu0 0.0
        %892 = vmatpush.msra.mxu0 0.0
        %893 = vmatpush.msra.mxu0 0.0
        %894 = vmatpush.msra.mxu0 0.0
        %895 = vmatpush.msra.mxu0 0.0
        %896 = vmatpush.msra.mxu0 0.0
        %v897 = vand.u32 %v601, 4294901760
        %v898 = vsub.f32 %v601, %v897
        %899 = vmatpush.msra.mxu0 %v898
        %v900 = vand.u32 %v599, 4294901760
        %v901 = vsub.f32 %v599, %v900
        %902 = vmatpush.msra.mxu0 %v901
        %v903 = vand.u32 %v618, 4294901760
        %v904 = vsub.f32 %v618, %v903
        %905 = vmatmul.f32.gmra.mxu0 %v904
        %v906 = vpop.f32.mrf.mxu0
        %v907 = vadd.f32 %v877, %v906
        %v908 = vand.u32 %v621, 4294901760
        %v909 = vsub.f32 %v621, %v908
        %910 = vmatmul.f32.gmra.mxu0 %v909
        %v911 = vpop.f32.mrf.mxu0
        %v912 = vadd.f32 %v881, %v911
        %913 = vdwg.mxu0
        %914 = vmatpush.msra.mxu0 0.0
        %915 = vmatpush.msra.mxu0 0.0
        %916 = vmatpush.msra.mxu0 0.0
        %917 = vmatpush.msra.mxu0 0.0
        %918 = vmatpush.msra.mxu0 0.0
        %919 = vmatpush.msra.mxu0 0.0
        %920 = vmatpush.msra.mxu0 0.0
        %921 = vmatpush.msra.mxu0 0.0
        %922 = vmatpush.msra.mxu0 0.0
        %923 = vmatpush.msra.mxu0 0.0
        %924 = vmatpush.msra.mxu0 0.0
        %925 = vmatpush.msra.mxu0 0.0
        %926 = vmatpush.msra.mxu0 0.0
        %927 = vmatpush.msra.mxu0 0.0
        %v928 = vand.u32 %v601, 4294901760
        %929 = vmatpush.msra.mxu0 %v928
        %v930 = vand.u32 %v599, 4294901760
        %931 = vmatpush.msra.mxu0 %v930
        %v932 = vand.u32 %v618, 4294901760
        %v933 = vsub.f32 %v618, %v932
        %v934 = vand.u32 %v933, 4294901760
        %935 = vmatmul.f32.gmra.mxu0 %v934
        %v936 = vpop.f32.mrf.mxu0
        %v937 = vadd.f32 %v907, %v936
        %v938 = vand.u32 %v621, 4294901760
        %v939 = vsub.f32 %v621, %v938
        %v940 = vand.u32 %v939, 4294901760
        %941 = vmatmul.f32.gmra.mxu0 %v940
        %v942 = vpop.f32.mrf.mxu0
        %v943 = vadd.f32 %v912, %v942
        %944 = vdwg.mxu0
        %945 = vmatpush.msra.mxu0 0.0
        %946 = vmatpush.msra.mxu0 0.0
        %947 = vmatpush.msra.mxu0 0.0
        %948 = vmatpush.msra.mxu0 0.0
        %949 = vmatpush.msra.mxu0 0.0
        %950 = vmatpush.msra.mxu0 0.0
        %951 = vmatpush.msra.mxu0 0.0
        %952 = vmatpush.msra.mxu0 0.0
        %953 = vmatpush.msra.mxu0 0.0
        %954 = vmatpush.msra.mxu0 0.0
        %955 = vmatpush.msra.mxu0 0.0
        %956 = vmatpush.msra.mxu0 0.0
        %957 = vmatpush.msra.mxu0 0.0
        %958 = vmatpush.msra.mxu0 0.0
        %v959 = vand.u32 %v601, 4294901760
        %v960 = vsub.f32 %v601, %v959
        %v961 = vand.u32 %v960, 4294901760
        %962 = vmatpush.msra.mxu0 %v961
        %v963 = vand.u32 %v599, 4294901760
        %v964 = vsub.f32 %v599, %v963
        %v965 = vand.u32 %v964, 4294901760
        %966 = vmatpush.msra.mxu0 %v965
        %v967 = vand.u32 %v618, 4294901760
        %968 = vmatmul.f32.gmra.mxu0 %v967
        %v969 = vpop.f32.mrf.mxu0
        %v970 = vadd.f32 %v937, %v969
        %v971 = vand.u32 %v621, 4294901760
        %972 = vmatmul.f32.gmra.mxu0 %v971
        %v973 = vpop.f32.mrf.mxu0
        %v974 = vadd.f32 %v943, %v973
        %975 = vdwg.mxu0
        %976 = vmatpush.msra.mxu0 0.0
        %977 = vmatpush.msra.mxu0 0.0
        %978 = vmatpush.msra.mxu0 0.0
        %979 = vmatpush.msra.mxu0 0.0
        %980 = vmatpush.msra.mxu0 0.0
        %981 = vmatpush.msra.mxu0 0.0
        %982 = vmatpush.msra.mxu0 0.0
        %983 = vmatpush.msra.mxu0 0.0
        %984 = vmatpush.msra.mxu0 0.0
        %985 = vmatpush.msra.mxu0 0.0
        %986 = vmatpush.msra.mxu0 0.0
        %987 = vmatpush.msra.mxu0 0.0
        %988 = vmatpush.msra.mxu0 0.0
        %989 = vmatpush.msra.mxu0 0.0
        %v990 = vand.u32 %v601, 4294901760
        %991 = vmatpush.msra.mxu0 %v990
        %v992 = vand.u32 %v599, 4294901760
        %993 = vmatpush.msra.mxu0 %v992
        %v994 = vand.u32 %v618, 4294901760
        %995 = vmatmul.f32.gmra.mxu0 %v994
        %v996 = vpop.f32.mrf.mxu0
        %v997 = vadd.f32 %v970, %v996
        %v998 = vand.u32 %v621, 4294901760
        %999 = vmatmul.f32.gmra.mxu0 %v998
        %v1000 = vpop.f32.mrf.mxu0
        %v1001 = vadd.f32 %v974, %v1000
        %1002 = vdwg.mxu0
        %1003 = vst [vmem:[%s271] sm:$0xff] %v807
        %1004 = vst [vmem:[%s271 + $0x8] sm:$0xff] %v997
        %1005 = vst [vmem:[%s271 + $0x10] sm:$0xff] %v811
        %1006 = vst [vmem:[%s271 + $0x18] sm:$0xff] %v1001
        %s1007 = sand.u32 %s181, 1
        %s1008 = scalar_lea.sflag [#allocation3], %s1007
        %s1009 = sand.u32 %s181, 1
        %s1010 = smul.addr %s1009, 32
        %s1011 = scalar_lea.vmem [#allocation2], %s1010
        // Predicated region
        $region49: #{tpu_custom_call.1} parent=47 // pred_check
          %p1012 = pneg %p191
        $region50: #{tpu_custom_call.1} parent=47 // pred_check_branch
          %1014 = sbr.rel (%p1012) target = $region52
        $region51: #{tpu_custom_call.1} parent=47 // pred_region
          %1016 = vsyncadd %s1008, 0
          %s1017 = smul.addr %s21, 4
          %s1018 = smul.addr %s1017, 8
          %s1019 = scalar_lea.hbm %s7, %s1018
          %s1020 = sshll.u32 %s1011, 4
          %s1021 = int_to_ptr.vmem [resolvable:$true] %s1020
          %s1022 = sshll.u32 %s1019, 4
          %s1023 = int_to_ptr.hbm [resolvable:$true] %s1022
          %1028 = dma.vmem_to_hbm [thread:$0]  %s1021, 512, %s1023, %s1008, 256, 256, 16
        $region52: #{tpu_custom_call.1} parent=47 // pred_fallthru
          _
      $region48: #{tpu_custom_call.1} parent=5 // pred_fallthru
        _
      %p1029 = scmp.le.s32.totalorder 2, %s16
      // Predicated region
      $region53: #{tpu_custom_call.1} parent=5 // pred_check
        %p1030 = pneg %p1029
      $region54: #{tpu_custom_call.1} parent=5 // pred_check_branch
        %1032 = sbr.rel (%p1030) target = $region56
      $region55: #{tpu_custom_call.1} parent=5 // pred_region
        %s1033 = ssub.s32 %s16, 2
        // Predicated region
        $region57: #{tpu_custom_call.1} parent=55 // pred_check
          %p1034 = pneg %p197
        $region58: #{tpu_custom_call.1} parent=55 // pred_check_branch
          %1036 = sbr.rel (%p1034) target = $region60
        $region59: #{tpu_custom_call.1} parent=55 // pred_region
          %s1037 = sand.u32 %s182, 1
          %s1038 = scalar_lea.sflag [#allocation3], %s1037
          %s1039 = sand.u32 %s182, 1
          %s1040 = smul.addr %s1039, 32
          %s1041 = scalar_lea.vmem [#allocation2], %s1040
          %1043 = dma.done %s1038, 512
        $region60: #{tpu_custom_call.1} parent=55 // pred_fallthru
          _
      $region56: #{tpu_custom_call.1} parent=5 // pred_fallthru
        _
    $region6: #{tpu_custom_call.1} parent=1 // loop_footer
      %s20 = sadd.s32 1, %s16
    $region7: #{tpu_custom_call.1} parent=1 // loop_footer_branch
      %15 = sbr.rel target = $region3
    $region8: #{tpu_custom_call.1} parent=1 // loop_exit
      _
    %1044 = vsyncpa [#allocation3], 1
    %s1045 = scalar_lea.sflag [#allocation3], 1
    %1046 = vsyncpa %s1045, 1

</llo_original>
